<compile_context>
chip_gen: v7x
topology: tpu7x:2x2x1
jax: 0.10.0
libtpu: 0.0.40
codegen_flags: <defaults>
</compile_context>

<pallas_src>
import jax
import jax.numpy as jnp
from jax.experimental import pallas as pl
from jax.experimental.pallas import tpu as pltpu

_LANE = 128


def _nlm_kernel(a_ref, b_ref, out_ref):
    # a_ref: (1, c, tm) query tile; b_ref: (1, c, tn) key tile; out_ref: (1, tm, tn).
    # Contract the channel dim (dim 0 of both operands) -> (tm, tn) on the MXU with an
    # f32 accumulator; cast only at the store.
    out_ref[0] = jax.lax.dot_general(
        a_ref[0],
        b_ref[0],
        dimension_numbers=(((0,), (0,)), ((), ())),
        preferred_element_type=jnp.float32,
    ).astype(out_ref.dtype)


def _round_up(x, m):
    return ((x + m - 1) // m) * m


def nlm_wosoft(in1, in2, *, is_norm=False, l2_norm=False,
               out_dtype=jnp.float32, compute_dtype=None,
               vmem_budget_bytes=12 * 1024 * 1024):
    """Pallas implementation of NLM_woSoft.forward.

    in1, in2: (n, c, h, w) float arrays. Returns affinity (n, h*w, h*w) in `out_dtype`
    (bfloat16 halves the writeback traffic of this store-bound kernel if the consumer
    tolerates it; default f32 for exact parity with the reference).
    """
    # TODO(synk): is_norm=True uses a lazily-initialized trainable LayerNorm whose
    # gamma/beta are sized from the runtime activation; not implemented (default False).
    assert not is_norm, "is_norm=True path not implemented"

    n, c, h, w = in1.shape
    N = h * w
    x1 = in1.reshape(n, c, N)
    x2 = in2.reshape(n, c, N)

    if l2_norm:
        # featureL2Norm: x / sqrt(sum_c(x^2) + eps), hoisted out of the tiled loop.
        eps = 1e-6
        x1 = x1 * jax.lax.rsqrt(jnp.sum(x1 * x1, axis=1, keepdims=True) + eps)
        x2 = x2 * jax.lax.rsqrt(jnp.sum(x2 * x2, axis=1, keepdims=True) + eps)

    if compute_dtype is not None:
        # Optional bf16 inputs: halves input DMA / resident-slab VMEM, native MXU rate.
        x1 = x1.astype(compute_dtype)
        x2 = x2.astype(compute_dtype)

    # Pad the pixel axis to a multiple of 128: unmasked lane-dense stores, legal tiles.
    n_pad = max(_round_up(N, _LANE), _LANE)
    if n_pad != N:
        pad = [(0, 0), (0, 0), (0, n_pad - N)]
        x1 = jnp.pad(x1, pad)
        x2 = jnp.pad(x2, pad)

    in_itemsize = jnp.dtype(x1.dtype).itemsize
    out_itemsize = jnp.dtype(out_dtype).itemsize

    def footprint(tm_, tn_):
        # Double-buffered VMEM footprint of the three pipelined blocks.
        return (2 * c * tm_ * in_itemsize
                + 2 * c * tn_ * in_itemsize
                + 2 * tm_ * tn_ * out_itemsize)

    # Pick the largest legal (tm, tn) that fits the conservative VMEM budget.
    # tn == n_pad means the whole key slab stays resident per batch.
    tm, tn = _LANE, _LANE
    found = False
    for tm_c in (256, 128):
        if n_pad % tm_c:
            continue
        for tn_c in (n_pad, 4096, 2048, 1024, 512, 256, 128):
            if tn_c > n_pad or n_pad % tn_c:
                continue
            if footprint(tm_c, tn_c) <= vmem_budget_bytes:
                tm, tn = tm_c, tn_c
                found = True
                break
        if found:
            break

    if tn == n_pad:
        # Resident key slab: x2 DMA'd once per batch (block index invariant over i);
        # output store is a fully contiguous (tm, n_pad) slab.
        grid = (n, n_pad // tm)
        in_specs = [
            pl.BlockSpec((1, c, tm), lambda b, i: (b, 0, i)),       # query rows
            pl.BlockSpec((1, c, n_pad), lambda b, i: (b, 0, 0)),    # resident keys
        ]
        out_specs = pl.BlockSpec((1, tm, n_pad), lambda b, i: (b, i, 0))
        in_bytes = 2 * n * c * n_pad * in_itemsize                  # each read once
    else:
        # Tiled fallback: row axis innermost so the large key tile is not re-fetched
        # across the inner axis; only the small query tile is re-read (N_pad//tn times).
        grid = (n, n_pad // tn, n_pad // tm)
        in_specs = [
            pl.BlockSpec((1, c, tm), lambda b, j, i: (b, 0, i)),    # query rows
            pl.BlockSpec((1, c, tn), lambda b, j, i: (b, 0, j)),    # key cols
        ]
        out_specs = pl.BlockSpec((1, tm, tn), lambda b, j, i: (b, i, j))
        in_bytes = n * c * n_pad * in_itemsize * (1 + n_pad // tn)  # x1 re-reads counted

    out_bytes = n * n_pad * n_pad * out_itemsize
    cost = pl.CostEstimate(
        flops=2 * n * n_pad * n_pad * c,
        transcendentals=0,
        bytes_accessed=out_bytes + in_bytes,
    )

    affinity = pl.pallas_call(
        _nlm_kernel,
        out_shape=jax.ShapeDtypeStruct((n, n_pad, n_pad), out_dtype),
        grid_spec=pltpu.PrefetchScalarGridSpec(
            num_scalar_prefetch=0,
            grid=grid,
            in_specs=in_specs,
            out_specs=out_specs,
        ),
        compiler_params=pltpu.CompilerParams(
            dimension_semantics=("parallel",) * len(grid)
        ),
        cost_estimate=cost,
    )(x1, x2)

    if n_pad != N:
        affinity = affinity[:, :N, :N]
    return affinity


if __name__ == "__main__":
    key = jax.random.PRNGKey(0)
    k1, k2, k3, k4 = jax.random.split(key, 4)

    n, c, h, w = 2, 4, 16, 16  # N = h*w = 256
    in1 = jax.random.normal(k1, (n, c, h, w), dtype=jnp.float32)
    in2 = jax.random.normal(k2, (n, c, h, w), dtype=jnp.float32)

    x1 = in1.reshape(n, c, h * w)
    x2 = in2.reshape(n, c, h * w)
    # Reference: torch.bmm(in1.view(n,c,-1).permute(0,2,1), in2.view(n,c,-1)).
    ref = jnp.einsum("bcn,bcm->bnm", x1, x2)

    # Default path: plain dot-product affinity, f32 writeback.
    affinity = jax.block_until_ready(nlm_wosoft(in1, in2))
    assert affinity.shape == (n, h * w, h * w)
    assert jnp.allclose(affinity, ref, atol=1e-5, rtol=1e-5)

    # L2-normalized path.
    affinity_l2 = jax.block_until_ready(nlm_wosoft(in1, in2, l2_norm=True))
    eps = 1e-6
    x1n = x1 / jnp.sqrt(jnp.sum(x1 * x1, axis=1, keepdims=True) + eps)
    x2n = x2 / jnp.sqrt(jnp.sum(x2 * x2, axis=1, keepdims=True) + eps)
    ref_l2 = jnp.einsum("bcn,bcm->bnm", x1n, x2n)
    assert jnp.allclose(affinity_l2, ref_l2, atol=1e-5, rtol=1e-5)

    # bf16 writeback variant (halves HBM store traffic; f32 MXU accumulate retained).
    affinity_bf16 = jax.block_until_ready(nlm_wosoft(in1, in2, out_dtype=jnp.bfloat16))
    assert affinity_bf16.dtype == jnp.bfloat16
    assert jnp.allclose(affinity_bf16.astype(jnp.float32), ref, atol=5e-2, rtol=5e-2)

    # Non-128-divisible spatial size exercises the pad-to-128 path (N = 14*14 = 196).
    n2, c2, h2, w2 = 1, 4, 14, 14
    a1 = jax.random.normal(k3, (n2, c2, h2, w2), dtype=jnp.float32)
    a2 = jax.random.normal(k4, (n2, c2, h2, w2), dtype=jnp.float32)
    aff_odd = jax.block_until_ready(nlm_wosoft(a1, a2))
    ref_odd = jnp.einsum("bcn,bcm->bnm", a1.reshape(n2, c2, -1), a2.reshape(n2, c2, -1))
    assert aff_odd.shape == (n2, h2 * w2, h2 * w2)
    assert jnp.allclose(aff_odd, ref_odd, atol=1e-5, rtol=1e-5)

    print("KERNEL_OK")
</pallas_src>

<mosaic_0001>
module attributes {stable_mosaic.version = 11 : i64} {
  func.func @_nlm_kernel(%arg0: i32, %arg1: i32, %arg2: memref<1x4x256xf32, #tpu.memory_space<vmem>>, %arg3: memref<1x4x256xf32, #tpu.memory_space<vmem>>, %arg4: memref<1x256x256xf32, #tpu.memory_space<vmem>>) attributes {dimension_semantics = [#tpu.dimension_semantics<parallel>, #tpu.dimension_semantics<parallel>], iteration_bounds = array<i64: 2, 1>, scalar_prefetch = 0 : i64, scratch_operands = 0 : i64, tpu.core_type = #tpu.core_type<tc>, window_params = [{transform_indices = @transform_0, window_bounds = array<i64: 1, 4, 256>}, {transform_indices = @transform_1, window_bounds = array<i64: 1, 4, 256>}, {transform_indices = @transform_2, window_bounds = array<i64: 1, 256, 256>}]} {
    %c0 = arith.constant 0 : index
    %c0_0 = arith.constant 0 : index
    %c0_1 = arith.constant 0 : index
    %0 = vector.load %arg2[%c0, %c0_0, %c0_1] : memref<1x4x256xf32, #tpu.memory_space<vmem>>, vector<1x4x256xf32>
    %1 = vector.shape_cast %0 : vector<1x4x256xf32> to vector<4x256xf32>
    %c0_2 = arith.constant 0 : index
    %c0_3 = arith.constant 0 : index
    %c0_4 = arith.constant 0 : index
    %2 = vector.load %arg3[%c0_2, %c0_3, %c0_4] : memref<1x4x256xf32, #tpu.memory_space<vmem>>, vector<1x4x256xf32>
    %3 = vector.shape_cast %2 : vector<1x4x256xf32> to vector<4x256xf32>
    %cst = arith.constant dense<0.000000e+00> : vector<256x256xf32>
    %4 = tpu.matmul %1, %3, %cst {dimension_numbers = #tpu.dot_dimension_numbers<[0], [0], [1], [1], [0, 1, 1, 1], [], []>} : vector<4x256xf32>, vector<4x256xf32>, vector<256x256xf32> -> vector<256x256xf32>
    %c0_5 = arith.constant 0 : index
    %c0_6 = arith.constant 0 : index
    %c0_7 = arith.constant 0 : index
    %5 = vector.load %arg4[%c0_5, %c0_6, %c0_7] : memref<1x256x256xf32, #tpu.memory_space<vmem>>, vector<1x256x256xf32>
    %6 = vector.shape_cast %5 : vector<1x256x256xf32> to vector<256x256xf32>
    %7 = vector.shape_cast %4 : vector<256x256xf32> to vector<1x256x256xf32>
    tpu.vector_store %arg4[%c0_5, %c0_6, %c0_7], %7 {strides = array<i32>} : memref<1x256x256xf32, #tpu.memory_space<vmem>>, vector<1x256x256xf32>,
    return
  }
  func.func @transform_0(%arg0: i32, %arg1: i32) -> (i32, i32, i32) {
    %c0_i32 = arith.constant 0 : i32
    %c0_i32_0 = arith.constant 0 : i32
    return %arg0, %c0_i32, %arg1 : i32, i32, i32
  }
  func.func @transform_1(%arg0: i32, %arg1: i32) -> (i32, i32, i32) {
    %c0_i32 = arith.constant 0 : i32
    %c0_i32_0 = arith.constant 0 : i32
    %c0_i32_1 = arith.constant 0 : i32
    return %arg0, %c0_i32, %c0_i32_0 : i32, i32, i32
  }
  func.func @transform_2(%arg0: i32, %arg1: i32) -> (i32, i32, i32) {
    %c0_i32 = arith.constant 0 : i32
    %c0_i32_0 = arith.constant 0 : i32
    return %arg0, %arg1, %c0_i32 : i32, i32, i32
  }
}

</mosaic_0001>

<llo_original>
// kernel: tpu_custom_call.1
$region0: #{tpu_custom_call.1}
  #allocation0 [shape = 'u32[]', space=smem, size = 0x4, offset = 0x4, fixed_abs, tag = 'smem constant byte address 0x4 - core index']
  #allocation1 [shape = 'u32[144,128]{1,0:T(1,128)}', space=vmem, size = 0x12000, scoped, tag = 'internal scratch']
  %s0 = inlined_call_operand.hbm [shape: f32[2,4,256], index: 0, kind: input, shape index: {}]
  %s1 = inlined_call_operand.hbm [shape: f32[2,4,256], index: 1, kind: input, shape index: {}]
  %s2 = inlined_call_operand.hbm [shape: f32[2,256,256], index: 2, kind: output, shape index: {}]
  %s3 = sld [smem:[#allocation0]]
  $region49: #{tpu_custom_call.1} parent=0
    _
  %s5 = ssub.s32 1, %s3
  %s6 = scalar_select 0, %s5, %s3
  $region1: #{tpu_custom_call.1} parent=0
    #allocation2 [shape = 'u8[8192]{0}', space=vmem, size = 0x2000, scoped, tag = 'input window, operand 0']
    #allocation3 [shape = 's32[2]{0}', space=sflag, size = 0x8, scoped, tag = 'scoped memory for tpu_custom_call.1']
    #allocation4 [shape = 's32[2]{0}', space=sflag, size = 0x8, scoped, tag = 'scoped memory for tpu_custom_call.1']
    #allocation5 [shape = 'u8[8192]{0}', space=vmem, size = 0x2000, scoped, tag = 'input window, operand 1']
    #allocation6 [shape = 's32[2]{0}', space=sflag, size = 0x8, scoped, tag = 'scoped memory for tpu_custom_call.1']
    #allocation7 [shape = 'u8[524288]{0}', space=vmem, size = 0x80000, scoped, tag = 'output window, operand 0']
    %7 = vsyncpa [#allocation3], 0
    %s8 = scalar_lea.sflag [#allocation3], 1
    %9 = vsyncpa %s8, 0
    %10 = vsyncpa [#allocation6], 0
    %s11 = scalar_lea.sflag [#allocation6], 1
    %12 = vsyncpa %s11, 0
    %13 = vsyncpa [#allocation4], 0
    %s14 = scalar_lea.sflag [#allocation4], 1
    %15 = vsyncpa %s14, 0
    loop: start=0, step=1, limit=4
    $region2: #{tpu_custom_call.1} parent=1 // loop_pre_header
      _
    $region3: #{tpu_custom_call.1} parent=1 // loop_header
      %s17 = sphi 0, %s21
      %p18 = scmp.ge.s32.totalorder %s17, 4
      %s24 = sphi 0, %s36
      %s25 = sphi 0, %s32
      %s26 = sphi 0, %s24
      %s27 = sphi 0, %s25
      %s28 = sphi 0, %s26
      %s29 = sphi 0, %s27
      %s41 = sphi 0, %s43
      %s44 = sphi 0, %s41
      %s45 = sphi 0, %s44
      %s61 = sphi 0, %s45
      %s67 = sphi 0, %s69
      %s70 = sphi 0, %s67
      %s71 = sphi 0, %s70
      %s87 = sphi 0, %s71
      %s95 = sphi 0, %s97
      %s98 = sphi 0, %s95
      %s99 = sphi 0, %s98
      %s115 = sphi 0, %s99
    $region4: #{tpu_custom_call.1} parent=1 // loop_header_branch
      %20 = sbr.rel (%p18) target = $region8
    $region5: #{tpu_custom_call.1} parent=1 // loop_body
      %s22 = ssub.s32 %s17, 1
      %s23 = ssub.s32 %s17, 2
      %s30 = sadd.s32 1, %s25
      %p31 = scmp.ge.s32.totalorder %s30, 1
      %s32 = scalar_select %p31, 0, %s30
      %s33 = sadd.s32 1, %s24
      %s34 = scalar_select %p31, %s33, %s24
      %p35 = scmp.ge.s32.totalorder %s34, 2
      %s36 = scalar_select %p35, 0, %s34
      %s37 = ssub.s32 %s24, %s36
      %s38 = ssub.s32 %s25, %s32
      %s39 = sor.u32 %s37, %s38
      %p40 = scmp.eq.s32.totalorder %s39, 0
      %s42 = sadd.s32 %s41, 1
      %s43 = scalar_select %p40, %s41, %s42
      %p46 = pneg %p40
      %p47 = scmp.eq.s32.totalorder %s17, 1
      %p48 = por %p46, %p47
      %p49 = scmp.ne.s32.totalorder %s41, %s44
      %p50 = scmp.eq.s32.totalorder %s17, 0
      %p51 = por %p49, %p50
      %p52 = scmp.ne.s32.totalorder %s41, %s44
      %p53 = scmp.eq.s32.totalorder %s22, 1
      %p54 = por %p52, %p53
      %p55 = scmp.ne.s32.totalorder %s44, %s45
      %p56 = scmp.eq.s32.totalorder %s22, 0
      %p57 = por %p55, %p56
      %p58 = scmp.ne.s32.totalorder %s44, %s45
      %p59 = scmp.eq.s32.totalorder %s23, 1
      %p60 = por %p58, %p59
      %p62 = scmp.ne.s32.totalorder %s45, %s61
      %p63 = scmp.eq.s32.totalorder %s23, 0
      %p64 = por %p62, %p63
      %s65 = ssub.s32 %s24, %s36
      %p66 = scmp.eq.s32.totalorder %s65, 0
      %s68 = sadd.s32 %s67, 1
      %s69 = scalar_select %p66, %s67, %s68
      %p72 = pneg %p66
      %p73 = scmp.eq.s32.totalorder %s17, 1
      %p74 = por %p72, %p73
      %p75 = scmp.ne.s32.totalorder %s67, %s70
      %p76 = scmp.eq.s32.totalorder %s17, 0
      %p77 = por %p75, %p76
      %p78 = scmp.ne.s32.totalorder %s67, %s70
      %p79 = scmp.eq.s32.totalorder %s22, 1
      %p80 = por %p78, %p79
      %p81 = scmp.ne.s32.totalorder %s70, %s71
      %p82 = scmp.eq.s32.totalorder %s22, 0
      %p83 = por %p81, %p82
      %p84 = scmp.ne.s32.totalorder %s70, %s71
      %p85 = scmp.eq.s32.totalorder %s23, 1
      %p86 = por %p84, %p85
      %p88 = scmp.ne.s32.totalorder %s71, %s87
      %p89 = scmp.eq.s32.totalorder %s23, 0
      %p90 = por %p88, %p89
      %s91 = ssub.s32 %s24, %s36
      %s92 = ssub.s32 %s25, %s32
      %s93 = sor.u32 %s91, %s92
      %p94 = scmp.eq.s32.totalorder %s93, 0
      %s96 = sadd.s32 %s95, 1
      %s97 = scalar_select %p94, %s95, %s96
      %p100 = pneg %p94
      %p101 = scmp.eq.s32.totalorder %s17, 1
      %p102 = por %p100, %p101
      %p103 = scmp.ne.s32.totalorder %s95, %s98
      %p104 = scmp.eq.s32.totalorder %s17, 0
      %p105 = por %p103, %p104
      %p106 = scmp.ne.s32.totalorder %s95, %s98
      %p107 = scmp.eq.s32.totalorder %s22, 1
      %p108 = por %p106, %p107
      %p109 = scmp.ne.s32.totalorder %s98, %s99
      %p110 = scmp.eq.s32.totalorder %s22, 0
      %p111 = por %p109, %p110
      %p112 = scmp.ne.s32.totalorder %s98, %s99
      %p113 = scmp.eq.s32.totalorder %s23, 1
      %p114 = por %p112, %p113
      %p116 = scmp.ne.s32.totalorder %s99, %s115
      %p117 = scmp.eq.s32.totalorder %s23, 0
      %p118 = por %p116, %p117
      %p119 = scmp.le.s32.totalorder 1, %s17
      %p120 = scmp.lt.s32.totalorder %s17, 3
      %p121 = pnand %p119, %p120
      %p122 = pneg %p121
      // Predicated region
      $region9: #{tpu_custom_call.1} parent=5 // pred_check
        _
      $region10: #{tpu_custom_call.1} parent=5 // pred_check_branch
        %124 = sbr.rel (%p121) target = $region12
      $region11: #{tpu_custom_call.1} parent=5 // pred_region
        %s125 = ssub.s32 %s17, 1
      $region12: #{tpu_custom_call.1} parent=5 // pred_fallthru
        _
      %p126 = scmp.lt.s32.totalorder %s17, 2
      // Predicated region
      $region13: #{tpu_custom_call.1} parent=5 // pred_check
        %p127 = pneg %p126
      $region14: #{tpu_custom_call.1} parent=5 // pred_check_branch
        %129 = sbr.rel (%p127) target = $region16
      $region15: #{tpu_custom_call.1} parent=5 // pred_region
        // Predicated region
        $region17: #{tpu_custom_call.1} parent=15 // pred_check
          %p130 = pneg %p51
        $region18: #{tpu_custom_call.1} parent=15 // pred_check_branch
          %132 = sbr.rel (%p130) target = $region20
        $region19: #{tpu_custom_call.1} parent=15 // pred_region
          %s133 = sand.u32 %s41, 1
          %s134 = scalar_lea.sflag [#allocation3], %s133
          %s135 = sand.u32 %s41, 1
          %s136 = smul.addr %s135, 8
          %s137 = scalar_lea.vmem [#allocation2], %s136
          %s138 = smul.u32 2, %s25
          %s140 = ssub.s32 128, 128
          %141 = vsyncadd %s134, %s140
          %s142 = smul.addr %s24, 2
          %s143 = sadd.s32 %s138, %s142
          %s144 = smul.addr %s143, 64
          %s145 = scalar_lea.hbm %s0, %s144
          %s147 = sshll.u32 %s137, 4
          %s148 = int_to_ptr.vmem [resolvable:$true] %s147
          %150 = dma.hbm_to_vmem [thread:$0]  %s145, 128, %s148, %s134
        $region20: #{tpu_custom_call.1} parent=15 // pred_fallthru
          _
        // Predicated region
        $region21: #{tpu_custom_call.1} parent=15 // pred_check
          %p151 = pneg %p77
        $region22: #{tpu_custom_call.1} parent=15 // pred_check_branch
          %153 = sbr.rel (%p151) target = $region24
        $region23: #{tpu_custom_call.1} parent=15 // pred_region
          %s154 = sand.u32 %s67, 1
          %s155 = scalar_lea.sflag [#allocation6], %s154
          %s156 = sand.u32 %s67, 1
          %s157 = smul.addr %s156, 8
          %s158 = scalar_lea.vmem [#allocation5], %s157
          %s160 = ssub.s32 128, 128
          %161 = vsyncadd %s155, %s160
          %s162 = smul.addr %s24, 2
          %s163 = smul.addr %s162, 64
          %s164 = scalar_lea.hbm %s1, %s163
          %s166 = sshll.u32 %s158, 4
          %s167 = int_to_ptr.vmem [resolvable:$true] %s166
          %169 = dma.hbm_to_vmem [thread:$0]  %s164, 128, %s167, %s155
        $region24: #{tpu_custom_call.1} parent=15 // pred_fallthru
          _
      $region16: #{tpu_custom_call.1} parent=5 // pred_fallthru
        _
      %p170 = scmp.le.s32.totalorder 1, %s17
      %p171 = scmp.lt.s32.totalorder %s17, 3
      %p172 = pnand %p170, %p171
      %p173 = pneg %p172
      // Predicated region
      $region25: #{tpu_custom_call.1} parent=5 // pred_check
        _
      $region26: #{tpu_custom_call.1} parent=5 // pred_check_branch
        %175 = sbr.rel (%p172) target = $region28
      $region27: #{tpu_custom_call.1} parent=5 // pred_region
        %s176 = ssub.s32 %s17, 1
        %s177 = sand.u32 %s44, 1
        %s178 = scalar_lea.sflag [#allocation3], %s177
        %s179 = sand.u32 %s44, 1
        %s180 = smul.addr %s179, 8
        %s181 = scalar_lea.vmem [#allocation2], %s180
        // Predicated region
        $region29: #{tpu_custom_call.1} parent=27 // pred_check
          %p182 = pneg %p57
        $region30: #{tpu_custom_call.1} parent=27 // pred_check_branch
          %184 = sbr.rel (%p182) target = $region32
        $region31: #{tpu_custom_call.1} parent=27 // pred_region
          %185 = dma.done %s178, 128
        $region32: #{tpu_custom_call.1} parent=27 // pred_fallthru
          _
        %s186 = sand.u32 %s70, 1
        %s187 = scalar_lea.sflag [#allocation6], %s186
        %s188 = sand.u32 %s70, 1
        %s189 = smul.addr %s188, 8
        %s190 = scalar_lea.vmem [#allocation5], %s189
        // Predicated region
        $region33: #{tpu_custom_call.1} parent=27 // pred_check
          %p191 = pneg %p83
        $region34: #{tpu_custom_call.1} parent=27 // pred_check_branch
          %193 = sbr.rel (%p191) target = $region36
        $region35: #{tpu_custom_call.1} parent=27 // pred_region
          %194 = dma.done %s187, 128
        $region36: #{tpu_custom_call.1} parent=27 // pred_fallthru
          _
        %s195 = sand.u32 %s44, 1
        %s196 = scalar_lea.sflag [#allocation3], %s195
        %s197 = sand.u32 %s44, 1
        %s198 = smul.addr %s197, 8
        %s199 = scalar_lea.vmem [#allocation2], %s198
        %p200 = pneg %p57
        %p201 = pneg %p54
        %s202 = sand.u32 %s70, 1
        %s203 = scalar_lea.sflag [#allocation6], %s202
        %s204 = sand.u32 %s70, 1
        %s205 = smul.addr %s204, 8
        %s206 = scalar_lea.vmem [#allocation5], %s205
        %p207 = pneg %p83
        %p208 = pneg %p80
        %p209 = pneg %p111
        %p210 = pneg %p108
        %s211 = sand.u32 %s98, 1
        %s212 = scalar_lea.sflag [#allocation4], %s211
        %s213 = sand.u32 %s98, 1
        %s214 = smul.addr %s213, 512
        %s215 = scalar_lea.vmem [#allocation7], %s214
        %s216 = smul.u32 2, %s27
        %s217 = smul.u32 32, %s27
        %v218 = vld [vmem:[%s181] sm:$0xff]
        %v219 = vld [vmem:[%s190] sm:$0xff]
        %v221 = vcombine.high %v218, %v218
        %223 = vxpose.xlu0.b32.start [1/16] %v218, 128
        %224 = vxpose.xlu0.b32.cont [2/16] 0.0, 128
        %225 = vxpose.xlu0.b32.cont [3/16] 0.0, 128
        %226 = vxpose.xlu0.b32.cont [4/16] 0.0, 128
        %227 = vxpose.xlu0.b32.cont [5/16] 0.0, 128
        %228 = vxpose.xlu0.b32.cont [6/16] 0.0, 128
        %229 = vxpose.xlu0.b32.cont [7/16] 0.0, 128
        %230 = vxpose.xlu0.b32.cont [8/16] 0.0, 128
        %231 = vxpose.xlu0.b32.cont [9/16] 0.0, 128
        %232 = vxpose.xlu0.b32.cont [10/16] 0.0, 128
        %233 = vxpose.xlu0.b32.cont [11/16] 0.0, 128
        %234 = vxpose.xlu0.b32.cont [12/16] 0.0, 128
        %235 = vxpose.xlu0.b32.cont [13/16] 0.0, 128
        %236 = vxpose.xlu0.b32.cont [14/16] 0.0, 128
        %237 = vxpose.xlu0.b32.cont [15/16] 0.0, 128
        %238 = vxpose.xlu0.b32.end [16/16] 0.0, 128
        %v239 = vpop.trf.xlu0
        %v240 = vpop.trf.xlu0
        %v241 = vpop.trf.xlu0
        %v242 = vpop.trf.xlu0
        %v243 = vpop.trf.xlu0
        %v244 = vpop.trf.xlu0
        %v245 = vpop.trf.xlu0
        %v246 = vpop.trf.xlu0
        %v247 = vpop.trf.xlu0
        %v248 = vpop.trf.xlu0
        %v249 = vpop.trf.xlu0
        %v250 = vpop.trf.xlu0
        %v251 = vpop.trf.xlu0
        %v252 = vpop.trf.xlu0
        %v253 = vpop.trf.xlu0
        %v254 = vpop.trf.xlu0
        %255 = vxpose.xlu0.b32.start [1/16] %v221, 128
        %256 = vxpose.xlu0.b32.cont [2/16] 0.0, 128
        %257 = vxpose.xlu0.b32.cont [3/16] 0.0, 128
        %258 = vxpose.xlu0.b32.cont [4/16] 0.0, 128
        %259 = vxpose.xlu0.b32.cont [5/16] 0.0, 128
        %260 = vxpose.xlu0.b32.cont [6/16] 0.0, 128
        %261 = vxpose.xlu0.b32.cont [7/16] 0.0, 128
        %262 = vxpose.xlu0.b32.cont [8/16] 0.0, 128
        %263 = vxpose.xlu0.b32.cont [9/16] 0.0, 128
        %264 = vxpose.xlu0.b32.cont [10/16] 0.0, 128
        %265 = vxpose.xlu0.b32.cont [11/16] 0.0, 128
        %266 = vxpose.xlu0.b32.cont [12/16] 0.0, 128
        %267 = vxpose.xlu0.b32.cont [13/16] 0.0, 128
        %268 = vxpose.xlu0.b32.cont [14/16] 0.0, 128
        %269 = vxpose.xlu0.b32.cont [15/16] 0.0, 128
        %270 = vxpose.xlu0.b32.end [16/16] 0.0, 128
        %v271 = vpop.trf.xlu0
        %v272 = vpop.trf.xlu0
        %v273 = vpop.trf.xlu0
        %v274 = vpop.trf.xlu0
        %v275 = vpop.trf.xlu0
        %v276 = vpop.trf.xlu0
        %v277 = vpop.trf.xlu0
        %v278 = vpop.trf.xlu0
        %v279 = vpop.trf.xlu0
        %v280 = vpop.trf.xlu0
        %v281 = vpop.trf.xlu0
        %v282 = vpop.trf.xlu0
        %v283 = vpop.trf.xlu0
        %v284 = vpop.trf.xlu0
        %v285 = vpop.trf.xlu0
        %v286 = vpop.trf.xlu0
        %v288 = vcombine.high %v219, %v219
        %vm289 = vcmask 31744
        %v291 = vsel %vm289, %v239, 0
        %v294 = vsel %vm289, %v240, 0
        %v297 = vsel %vm289, %v241, 0
        %v300 = vsel %vm289, %v242, 0
        %v303 = vsel %vm289, %v243, 0
        %v306 = vsel %vm289, %v244, 0
        %v309 = vsel %vm289, %v245, 0
        %v312 = vsel %vm289, %v246, 0
        %v315 = vsel %vm289, %v247, 0
        %v318 = vsel %vm289, %v248, 0
        %v321 = vsel %vm289, %v249, 0
        %v324 = vsel %vm289, %v250, 0
        %v327 = vsel %vm289, %v251, 0
        %v330 = vsel %vm289, %v252, 0
        %v333 = vsel %vm289, %v253, 0
        %v336 = vsel %vm289, %v254, 0
        %v339 = vsel %vm289, %v271, 0
        %v342 = vsel %vm289, %v272, 0
        %v345 = vsel %vm289, %v273, 0
        %v348 = vsel %vm289, %v274, 0
        %v351 = vsel %vm289, %v275, 0
        %v354 = vsel %vm289, %v276, 0
        %v357 = vsel %vm289, %v277, 0
        %v360 = vsel %vm289, %v278, 0
        %v363 = vsel %vm289, %v279, 0
        %v366 = vsel %vm289, %v280, 0
        %v369 = vsel %vm289, %v281, 0
        %v372 = vsel %vm289, %v282, 0
        %v375 = vsel %vm289, %v283, 0
        %v378 = vsel %vm289, %v284, 0
        %v381 = vsel %vm289, %v285, 0
        %v384 = vsel %vm289, %v286, 0
        %vm386 = vcmask 1043456
        %v387 = vsel %vm386, %v219, 0
        %v389 = vsel %vm386, %v288, 0
        %391 = vmatprep.subr.mxu0 %v389
        %392 = vmatpush1.msra.mxu0 %v387
        %393 = vmatprep.subr.mxu0 0.0
        %394 = vmatpush1.msra.mxu0 0.0
        %395 = vmatprep.subr.mxu0 0.0
        %396 = vmatpush1.msra.mxu0 0.0
        %397 = vmatprep.subr.mxu0 0.0
        %398 = vmatpush1.msra.mxu0 0.0
        %399 = vmatprep.subr.mxu0 0.0
        %400 = vmatpush1.msra.mxu0 0.0
        %401 = vmatprep.subr.mxu0 0.0
        %402 = vmatpush1.msra.mxu0 0.0
        %403 = vmatprep.subr.mxu0 0.0
        %404 = vmatpush1.msra.mxu0 0.0
        %405 = vmatprep.subr.mxu0 0.0
        %406 = vmatpush1.msra.mxu0 0.0
        %407 = vmatprep.subr.mxu0 0.0
        %408 = vmatpush1.msra.mxu0 0.0
        %409 = vmatprep.subr.mxu0 0.0
        %410 = vmatpush1.msra.mxu0 0.0
        %411 = vmatprep.subr.mxu0 0.0
        %412 = vmatpush1.msra.mxu0 0.0
        %413 = vmatprep.subr.mxu0 0.0
        %414 = vmatpush1.msra.mxu0 0.0
        %415 = vmatprep.subr.mxu0 0.0
        %416 = vmatpush1.msra.mxu0 0.0
        %417 = vmatprep.subr.mxu0 0.0
        %418 = vmatpush1.msra.mxu0 0.0
        %419 = vmatprep.subr.mxu0 0.0
        %420 = vmatpush1.msra.mxu0 0.0
        %421 = vmatprep.subr.mxu0 0.0
        %422 = vmatpush1.msra.mxu0 0.0
        %423 = vmatprep.subr.mxu0 0.0
        %424 = vmatpush1.msra.mxu0 0.0
        %425 = vmatprep.subr.mxu0 0.0
        %426 = vmatpush1.msra.mxu0 0.0
        %427 = vmatprep.subr.mxu0 0.0
        %428 = vmatpush1.msra.mxu0 0.0
        %429 = vmatprep.subr.mxu0 0.0
        %430 = vmatpush1.msra.mxu0 0.0
        %431 = vmatprep.subr.mxu0 0.0
        %432 = vmatpush1.msra.mxu0 0.0
        %433 = vmatprep.subr.mxu0 0.0
        %434 = vmatpush1.msra.mxu0 0.0
        %435 = vmatprep.subr.mxu0 0.0
        %436 = vmatpush1.msra.mxu0 0.0
        %437 = vmatprep.subr.mxu0 0.0
        %438 = vmatpush1.msra.mxu0 0.0
        %439 = vmatprep.subr.mxu0 0.0
        %440 = vmatpush1.msra.mxu0 0.0
        %441 = vmatprep.subr.mxu0 0.0
        %442 = vmatpush1.msra.mxu0 0.0
        %443 = vmatprep.subr.mxu0 0.0
        %444 = vmatpush1.msra.mxu0 0.0
        %445 = vmatprep.subr.mxu0 0.0
        %446 = vmatpush1.msra.mxu0 0.0
        %447 = vmatprep.subr.mxu0 0.0
        %448 = vmatpush1.msra.mxu0 0.0
        %449 = vmatprep.subr.mxu0 0.0
        %450 = vmatpush1.msra.mxu0 0.0
        %451 = vmatprep.subr.mxu0 0.0
        %452 = vmatpush1.msra.mxu0 0.0
        %453 = vmatprep.subr.mxu0 0.0
        %454 = vmatpush1.msra.mxu0 0.0
        %455 = vmatprep.mubr.f32.mxu0 0.0
        %456 = vmatmul.mubr.f32.gmra.mrb[0].mxu0 %v291
        %v457 = vpop.f32.mrb[0].mxu0
        %v458 = vadd.f32 0.0, %v457
        %v459 = vpop.f32.mrb[0].mxu0
        %v460 = vadd.f32 0.0, %v459
        %461 = vmatprep.mubr.f32.mxu0 0.0
        %462 = vmatmul.mubr.f32.gmra.mrb[0].mxu0 %v294
        %v463 = vpop.f32.mrb[0].mxu0
        %v464 = vadd.f32 0.0, %v463
        %v465 = vpop.f32.mrb[0].mxu0
        %v466 = vadd.f32 0.0, %v465
        %467 = vmatprep.mubr.f32.mxu0 0.0
        %468 = vmatmul.mubr.f32.gmra.mrb[0].mxu0 %v297
        %v469 = vpop.f32.mrb[0].mxu0
        %v470 = vadd.f32 0.0, %v469
        %v471 = vpop.f32.mrb[0].mxu0
        %v472 = vadd.f32 0.0, %v471
        %473 = vmatprep.mubr.f32.mxu0 0.0
        %474 = vmatmul.mubr.f32.gmra.mrb[0].mxu0 %v300
        %v475 = vpop.f32.mrb[0].mxu0
        %v476 = vadd.f32 0.0, %v475
        %v477 = vpop.f32.mrb[0].mxu0
        %v478 = vadd.f32 0.0, %v477
        %479 = vmatprep.mubr.f32.mxu0 0.0
        %480 = vmatmul.mubr.f32.gmra.mrb[0].mxu0 %v303
        %v481 = vpop.f32.mrb[0].mxu0
        %v482 = vadd.f32 0.0, %v481
        %v483 = vpop.f32.mrb[0].mxu0
        %v484 = vadd.f32 0.0, %v483
        %485 = vmatprep.mubr.f32.mxu0 0.0
        %486 = vmatmul.mubr.f32.gmra.mrb[0].mxu0 %v306
        %v487 = vpop.f32.mrb[0].mxu0
        %v488 = vadd.f32 0.0, %v487
        %v489 = vpop.f32.mrb[0].mxu0
        %v490 = vadd.f32 0.0, %v489
        %491 = vmatprep.mubr.f32.mxu0 0.0
        %492 = vmatmul.mubr.f32.gmra.mrb[0].mxu0 %v309
        %v493 = vpop.f32.mrb[0].mxu0
        %v494 = vadd.f32 0.0, %v493
        %v495 = vpop.f32.mrb[0].mxu0
        %v496 = vadd.f32 0.0, %v495
        %497 = vmatprep.mubr.f32.mxu0 0.0
        %498 = vmatmul.mubr.f32.gmra.mrb[0].mxu0 %v312
        %v499 = vpop.f32.mrb[0].mxu0
        %v500 = vadd.f32 0.0, %v499
        %v501 = vpop.f32.mrb[0].mxu0
        %v502 = vadd.f32 0.0, %v501
        %503 = vmatprep.mubr.f32.mxu0 0.0
        %504 = vmatmul.mubr.f32.gmra.mrb[0].mxu0 %v315
        %v505 = vpop.f32.mrb[0].mxu0
        %v506 = vadd.f32 0.0, %v505
        %v507 = vpop.f32.mrb[0].mxu0
        %v508 = vadd.f32 0.0, %v507
        %509 = vmatprep.mubr.f32.mxu0 0.0
        %510 = vmatmul.mubr.f32.gmra.mrb[0].mxu0 %v318
        %v511 = vpop.f32.mrb[0].mxu0
        %v512 = vadd.f32 0.0, %v511
        %v513 = vpop.f32.mrb[0].mxu0
        %v514 = vadd.f32 0.0, %v513
        %515 = vmatprep.mubr.f32.mxu0 0.0
        %516 = vmatmul.mubr.f32.gmra.mrb[0].mxu0 %v321
        %v517 = vpop.f32.mrb[0].mxu0
        %v518 = vadd.f32 0.0, %v517
        %v519 = vpop.f32.mrb[0].mxu0
        %v520 = vadd.f32 0.0, %v519
        %521 = vmatprep.mubr.f32.mxu0 0.0
        %522 = vmatmul.mubr.f32.gmra.mrb[0].mxu0 %v324
        %v523 = vpop.f32.mrb[0].mxu0
        %v524 = vadd.f32 0.0, %v523
        %v525 = vpop.f32.mrb[0].mxu0
        %v526 = vadd.f32 0.0, %v525
        %527 = vmatprep.mubr.f32.mxu0 0.0
        %528 = vmatmul.mubr.f32.gmra.mrb[0].mxu0 %v327
        %v529 = vpop.f32.mrb[0].mxu0
        %v530 = vadd.f32 0.0, %v529
        %v531 = vpop.f32.mrb[0].mxu0
        %v532 = vadd.f32 0.0, %v531
        %533 = vmatprep.mubr.f32.mxu0 0.0
        %534 = vmatmul.mubr.f32.gmra.mrb[0].mxu0 %v330
        %v535 = vpop.f32.mrb[0].mxu0
        %v536 = vadd.f32 0.0, %v535
        %v537 = vpop.f32.mrb[0].mxu0
        %v538 = vadd.f32 0.0, %v537
        %539 = vmatprep.mubr.f32.mxu0 0.0
        %540 = vmatmul.mubr.f32.gmra.mrb[0].mxu0 %v333
        %v541 = vpop.f32.mrb[0].mxu0
        %v542 = vadd.f32 0.0, %v541
        %v543 = vpop.f32.mrb[0].mxu0
        %v544 = vadd.f32 0.0, %v543
        %545 = vmatprep.mubr.f32.mxu0 0.0
        %546 = vmatmul.mubr.f32.gmra.mrb[0].mxu0 %v336
        %v547 = vpop.f32.mrb[0].mxu0
        %v548 = vadd.f32 0.0, %v547
        %v549 = vpop.f32.mrb[0].mxu0
        %v550 = vadd.f32 0.0, %v549
        %551 = vmatprep.mubr.f32.mxu0 0.0
        %552 = vmatmul.mubr.f32.gmra.mrb[0].mxu0 %v339
        %v553 = vpop.f32.mrb[0].mxu0
        %v554 = vadd.f32 0.0, %v553
        %v555 = vpop.f32.mrb[0].mxu0
        %v556 = vadd.f32 0.0, %v555
        %557 = vmatprep.mubr.f32.mxu0 0.0
        %558 = vmatmul.mubr.f32.gmra.mrb[0].mxu0 %v342
        %v559 = vpop.f32.mrb[0].mxu0
        %v560 = vadd.f32 0.0, %v559
        %v561 = vpop.f32.mrb[0].mxu0
        %v562 = vadd.f32 0.0, %v561
        %563 = vmatprep.mubr.f32.mxu0 0.0
        %564 = vmatmul.mubr.f32.gmra.mrb[0].mxu0 %v345
        %v565 = vpop.f32.mrb[0].mxu0
        %v566 = vadd.f32 0.0, %v565
        %v567 = vpop.f32.mrb[0].mxu0
        %v568 = vadd.f32 0.0, %v567
        %569 = vmatprep.mubr.f32.mxu0 0.0
        %570 = vmatmul.mubr.f32.gmra.mrb[0].mxu0 %v348
        %v571 = vpop.f32.mrb[0].mxu0
        %v572 = vadd.f32 0.0, %v571
        %v573 = vpop.f32.mrb[0].mxu0
        %v574 = vadd.f32 0.0, %v573
        %575 = vmatprep.mubr.f32.mxu0 0.0
        %576 = vmatmul.mubr.f32.gmra.mrb[0].mxu0 %v351
        %v577 = vpop.f32.mrb[0].mxu0
        %v578 = vadd.f32 0.0, %v577
        %v579 = vpop.f32.mrb[0].mxu0
        %v580 = vadd.f32 0.0, %v579
        %581 = vmatprep.mubr.f32.mxu0 0.0
        %582 = vmatmul.mubr.f32.gmra.mrb[0].mxu0 %v354
        %v583 = vpop.f32.mrb[0].mxu0
        %v584 = vadd.f32 0.0, %v583
        %v585 = vpop.f32.mrb[0].mxu0
        %v586 = vadd.f32 0.0, %v585
        %587 = vmatprep.mubr.f32.mxu0 0.0
        %588 = vmatmul.mubr.f32.gmra.mrb[0].mxu0 %v357
        %v589 = vpop.f32.mrb[0].mxu0
        %v590 = vadd.f32 0.0, %v589
        %v591 = vpop.f32.mrb[0].mxu0
        %v592 = vadd.f32 0.0, %v591
        %593 = vmatprep.mubr.f32.mxu0 0.0
        %594 = vmatmul.mubr.f32.gmra.mrb[0].mxu0 %v360
        %v595 = vpop.f32.mrb[0].mxu0
        %v596 = vadd.f32 0.0, %v595
        %v597 = vpop.f32.mrb[0].mxu0
        %v598 = vadd.f32 0.0, %v597
        %599 = vmatprep.mubr.f32.mxu0 0.0
        %600 = vmatmul.mubr.f32.gmra.mrb[0].mxu0 %v363
        %v601 = vpop.f32.mrb[0].mxu0
        %v602 = vadd.f32 0.0, %v601
        %v603 = vpop.f32.mrb[0].mxu0
        %v604 = vadd.f32 0.0, %v603
        %605 = vmatprep.mubr.f32.mxu0 0.0
        %606 = vmatmul.mubr.f32.gmra.mrb[0].mxu0 %v366
        %v607 = vpop.f32.mrb[0].mxu0
        %v608 = vadd.f32 0.0, %v607
        %v609 = vpop.f32.mrb[0].mxu0
        %v610 = vadd.f32 0.0, %v609
        %611 = vmatprep.mubr.f32.mxu0 0.0
        %612 = vmatmul.mubr.f32.gmra.mrb[0].mxu0 %v369
        %v613 = vpop.f32.mrb[0].mxu0
        %v614 = vadd.f32 0.0, %v613
        %v615 = vpop.f32.mrb[0].mxu0
        %v616 = vadd.f32 0.0, %v615
        %617 = vmatprep.mubr.f32.mxu0 0.0
        %618 = vmatmul.mubr.f32.gmra.mrb[0].mxu0 %v372
        %v619 = vpop.f32.mrb[0].mxu0
        %v620 = vadd.f32 0.0, %v619
        %v621 = vpop.f32.mrb[0].mxu0
        %v622 = vadd.f32 0.0, %v621
        %623 = vmatprep.mubr.f32.mxu0 0.0
        %624 = vmatmul.mubr.f32.gmra.mrb[0].mxu0 %v375
        %v625 = vpop.f32.mrb[0].mxu0
        %v626 = vadd.f32 0.0, %v625
        %v627 = vpop.f32.mrb[0].mxu0
        %v628 = vadd.f32 0.0, %v627
        %629 = vmatprep.mubr.f32.mxu0 0.0
        %630 = vmatmul.mubr.f32.gmra.mrb[0].mxu0 %v378
        %v631 = vpop.f32.mrb[0].mxu0
        %v632 = vadd.f32 0.0, %v631
        %v633 = vpop.f32.mrb[0].mxu0
        %v634 = vadd.f32 0.0, %v633
        %635 = vmatprep.mubr.f32.mxu0 0.0
        %636 = vmatmul.mubr.f32.gmra.mrb[0].mxu0 %v381
        %v637 = vpop.f32.mrb[0].mxu0
        %v638 = vadd.f32 0.0, %v637
        %v639 = vpop.f32.mrb[0].mxu0
        %v640 = vadd.f32 0.0, %v639
        %641 = vmatprep.mubr.f32.mxu0 0.0
        %642 = vmatmul.mubr.f32.gmra.mrb[0].mxu0 %v384
        %v643 = vpop.f32.mrb[0].mxu0
        %v644 = vadd.f32 0.0, %v643
        %v645 = vpop.f32.mrb[0].mxu0
        %v646 = vadd.f32 0.0, %v645
        %647 = vdwg.mxu0
        %648 = vst [vmem:[%s215] sm:$0xff] %v458
        %649 = vst [vmem:[%s215 + $0x8] sm:$0xff] %v460
        %650 = vst [vmem:[%s215 + $0x10] sm:$0xff] %v464
        %651 = vst [vmem:[%s215 + $0x18] sm:$0xff] %v466
        %652 = vst [vmem:[%s215 + $0x20] sm:$0xff] %v470
        %653 = vst [vmem:[%s215 + $0x28] sm:$0xff] %v472
        %654 = vst [vmem:[%s215 + $0x30] sm:$0xff] %v476
        %655 = vst [vmem:[%s215 + $0x38] sm:$0xff] %v478
        %656 = vst [vmem:[%s215 + $0x40] sm:$0xff] %v482
        %657 = vst [vmem:[%s215 + $0x48] sm:$0xff] %v484
        %658 = vst [vmem:[%s215 + $0x50] sm:$0xff] %v488
        %659 = vst [vmem:[%s215 + $0x58] sm:$0xff] %v490
        %660 = vst [vmem:[%s215 + $0x60] sm:$0xff] %v494
        %661 = vst [vmem:[%s215 + $0x68] sm:$0xff] %v496
        %662 = vst [vmem:[%s215 + $0x70] sm:$0xff] %v500
        %663 = vst [vmem:[%s215 + $0x78] sm:$0xff] %v502
        %664 = vst [vmem:[%s215 + $0x80] sm:$0xff] %v506
        %665 = vst [vmem:[%s215 + $0x88] sm:$0xff] %v508
        %666 = vst [vmem:[%s215 + $0x90] sm:$0xff] %v512
        %667 = vst [vmem:[%s215 + $0x98] sm:$0xff] %v514
        %668 = vst [vmem:[%s215 + $0xa0] sm:$0xff] %v518
        %669 = vst [vmem:[%s215 + $0xa8] sm:$0xff] %v520
        %670 = vst [vmem:[%s215 + $0xb0] sm:$0xff] %v524
        %671 = vst [vmem:[%s215 + $0xb8] sm:$0xff] %v526
        %672 = vst [vmem:[%s215 + $0xc0] sm:$0xff] %v530
        %673 = vst [vmem:[%s215 + $0xc8] sm:$0xff] %v532
        %674 = vst [vmem:[%s215 + $0xd0] sm:$0xff] %v536
        %675 = vst [vmem:[%s215 + $0xd8] sm:$0xff] %v538
        %676 = vst [vmem:[%s215 + $0xe0] sm:$0xff] %v542
        %677 = vst [vmem:[%s215 + $0xe8] sm:$0xff] %v544
        %678 = vst [vmem:[%s215 + $0xf0] sm:$0xff] %v548
        %679 = vst [vmem:[%s215 + $0xf8] sm:$0xff] %v550
        %680 = vst [vmem:[%s215 + $0x100] sm:$0xff] %v554
        %681 = vst [vmem:[%s215 + $0x108] sm:$0xff] %v556
        %682 = vst [vmem:[%s215 + $0x110] sm:$0xff] %v560
        %683 = vst [vmem:[%s215 + $0x118] sm:$0xff] %v562
        %684 = vst [vmem:[%s215 + $0x120] sm:$0xff] %v566
        %685 = vst [vmem:[%s215 + $0x128] sm:$0xff] %v568
        %686 = vst [vmem:[%s215 + $0x130] sm:$0xff] %v572
        %687 = vst [vmem:[%s215 + $0x138] sm:$0xff] %v574
        %688 = vst [vmem:[%s215 + $0x140] sm:$0xff] %v578
        %689 = vst [vmem:[%s215 + $0x148] sm:$0xff] %v580
        %690 = vst [vmem:[%s215 + $0x150] sm:$0xff] %v584
        %691 = vst [vmem:[%s215 + $0x158] sm:$0xff] %v586
        %692 = vst [vmem:[%s215 + $0x160] sm:$0xff] %v590
        %693 = vst [vmem:[%s215 + $0x168] sm:$0xff] %v592
        %694 = vst [vmem:[%s215 + $0x170] sm:$0xff] %v596
        %695 = vst [vmem:[%s215 + $0x178] sm:$0xff] %v598
        %696 = vst [vmem:[%s215 + $0x180] sm:$0xff] %v602
        %697 = vst [vmem:[%s215 + $0x188] sm:$0xff] %v604
        %698 = vst [vmem:[%s215 + $0x190] sm:$0xff] %v608
        %699 = vst [vmem:[%s215 + $0x198] sm:$0xff] %v610
        %700 = vst [vmem:[%s215 + $0x1a0] sm:$0xff] %v614
        %701 = vst [vmem:[%s215 + $0x1a8] sm:$0xff] %v616
        %702 = vst [vmem:[%s215 + $0x1b0] sm:$0xff] %v620
        %703 = vst [vmem:[%s215 + $0x1b8] sm:$0xff] %v622
        %704 = vst [vmem:[%s215 + $0x1c0] sm:$0xff] %v626
        %705 = vst [vmem:[%s215 + $0x1c8] sm:$0xff] %v628
        %706 = vst [vmem:[%s215 + $0x1d0] sm:$0xff] %v632
        %707 = vst [vmem:[%s215 + $0x1d8] sm:$0xff] %v634
        %708 = vst [vmem:[%s215 + $0x1e0] sm:$0xff] %v638
        %709 = vst [vmem:[%s215 + $0x1e8] sm:$0xff] %v640
        %710 = vst [vmem:[%s215 + $0x1f0] sm:$0xff] %v644
        %711 = vst [vmem:[%s215 + $0x1f8] sm:$0xff] %v646
        %s712 = sand.u32 %s98, 1
        %s713 = scalar_lea.sflag [#allocation4], %s712
        %s714 = sand.u32 %s98, 1
        %s715 = smul.addr %s714, 512
        %s716 = scalar_lea.vmem [#allocation7], %s715
        // Predicated region
        $region37: #{tpu_custom_call.1} parent=27 // pred_check
          %p717 = pneg %p108
        $region38: #{tpu_custom_call.1} parent=27 // pred_check_branch
          %719 = sbr.rel (%p717) target = $region40
        $region39: #{tpu_custom_call.1} parent=27 // pred_region
          %s720 = smul.u32 32, %s27
          %s722 = ssub.s32 8192, 8192
          %723 = vsyncadd %s713, %s722
          %s724 = smul.addr %s720, 2
          %s725 = smul.addr %s26, 64
          %s726 = sadd.s32 %s724, %s725
          %s727 = smul.addr %s726, 128
          %s728 = scalar_lea.hbm %s2, %s727
          %s729 = sshll.u32 %s716, 4
          %s730 = int_to_ptr.vmem [resolvable:$true] %s729
          %735 = dma.vmem_to_hbm [thread:$0]  %s730, 8192, %s728, %s713, 256, 256, 16
        $region40: #{tpu_custom_call.1} parent=27 // pred_fallthru
          _
      $region28: #{tpu_custom_call.1} parent=5 // pred_fallthru
        _
      %p736 = scmp.le.s32.totalorder 2, %s17
      // Predicated region
      $region41: #{tpu_custom_call.1} parent=5 // pred_check
        %p737 = pneg %p736
      $region42: #{tpu_custom_call.1} parent=5 // pred_check_branch
        %739 = sbr.rel (%p737) target = $region44
      $region43: #{tpu_custom_call.1} parent=5 // pred_region
        %s740 = ssub.s32 %s17, 2
        // Predicated region
        $region45: #{tpu_custom_call.1} parent=43 // pred_check
          %p741 = pneg %p114
        $region46: #{tpu_custom_call.1} parent=43 // pred_check_branch
          %743 = sbr.rel (%p741) target = $region48
        $region47: #{tpu_custom_call.1} parent=43 // pred_region
          %s744 = sand.u32 %s99, 1
          %s745 = scalar_lea.sflag [#allocation4], %s744
          %s746 = sand.u32 %s99, 1
          %s747 = smul.addr %s746, 512
          %s748 = scalar_lea.vmem [#allocation7], %s747
          %749 = dma.done %s745, 8192
        $region48: #{tpu_custom_call.1} parent=43 // pred_fallthru
          _
      $region44: #{tpu_custom_call.1} parent=5 // pred_fallthru
        _
    $region6: #{tpu_custom_call.1} parent=1 // loop_footer
      %s21 = sadd.s32 1, %s17
    $region7: #{tpu_custom_call.1} parent=1 // loop_footer_branch
      %16 = sbr.rel target = $region3
    $region8: #{tpu_custom_call.1} parent=1 // loop_exit
      _
    %750 = vsyncpa [#allocation3], 1
    %s751 = scalar_lea.sflag [#allocation3], 1
    %752 = vsyncpa %s751, 1
    %753 = vsyncpa [#allocation6], 1
    %s754 = scalar_lea.sflag [#allocation6], 1
    %755 = vsyncpa %s754, 1
    %756 = vsyncpa [#allocation4], 1
    %s757 = scalar_lea.sflag [#allocation4], 1
    %758 = vsyncpa %s757, 1

</llo_original>
